<compile_context>
chip_gen: v5e
topology: v5e:2x2
jax: 0.10.0
libtpu: 0.0.40
codegen_flags: <defaults>
</compile_context>

<pallas_src>
import jax
import jax.numpy as jnp
from jax.experimental import pallas as pl
from jax.experimental.pallas import tpu as pltpu

_LANE = 128                      # dense lane width
_TARGET_BLOCK_BYTES = 2 << 20    # ~2 MiB per block, sized in fp32 terms


def _softmax2d_kernel(x_ref, o_ref):
    # x_ref / o_ref: (1, C, TR, LANE) tile resident in VMEM.
    x = x_ref[...].astype(jnp.float32)
    m = jnp.max(x, axis=1, keepdims=True)          # reduce over channels (VPU)
    e = jnp.exp(x - m)                             # EUP
    s = jnp.sum(e, axis=1, keepdims=True)          # VPU
    inv = pl.reciprocal(s, approx=True)            # EUP (free slot)
    inv = inv * (2.0 - s * inv)                    # one Newton step -> fp32 accuracy
    o_ref[...] = (e * inv).astype(o_ref.dtype)


def softmax2d(x):
    """Softmax over dim=-3 for 3D (C,H,W) or 4D (N,C,H,W) inputs (PyTorch Softmax2d)."""
    if x.ndim not in (3, 4):
        raise ValueError(
            f"Softmax2d: expected input to be 3D or 4D, got {x.ndim}D instead")

    squeeze_batch = False
    if x.ndim == 3:
        x = x[None]              # (1, C, H, W)
        squeeze_batch = True

    N, C, H, W = x.shape
    HW = H * W
    rows_needed = pl.cdiv(HW, _LANE)

    # Rows per block at ~_TARGET_BLOCK_BYTES of fp32 (input upcast + exp temps).
    rows_for_target = max(8, (_TARGET_BLOCK_BYTES // (C * _LANE * 4)) // 8 * 8)

    if rows_needed <= rows_for_target:
        # Single spatial block per batch element: the block's second-to-last dim
        # equals the full array dim, so no 8-row sublane padding is needed.
        tr = rows_needed
        num_blocks = 1
    else:
        # Tiled spatial dim: tile rows must be a multiple of 8 (sublanes).
        tr = rows_for_target
        num_blocks = pl.cdiv(rows_needed, tr)

    s_pad = num_blocks * tr
    hw_pad = s_pad * _LANE

    # --- lane-dense (possibly padded) layout: (N, C, s_pad, LANE) ---
    # Zero padding is harmless for softmax (exp(0)/C in the padded tail) and is
    # sliced away after the kernel.
    x_flat = x.reshape(N, C, HW)
    pad = hw_pad - HW
    if pad:
        x_flat = jnp.pad(x_flat, ((0, 0), (0, 0), (0, pad)))
    x4 = x_flat.reshape(N, C, s_pad, _LANE)

    out4 = pl.pallas_call(
        _softmax2d_kernel,
        out_shape=jax.ShapeDtypeStruct((N, C, s_pad, _LANE), x.dtype),
        grid_spec=pltpu.PrefetchScalarGridSpec(
            num_scalar_prefetch=0,
            grid=(N, num_blocks),
            in_specs=[pl.BlockSpec((1, C, tr, _LANE), lambda n, s: (n, 0, s, 0))],
            out_specs=pl.BlockSpec((1, C, tr, _LANE), lambda n, s: (n, 0, s, 0)),
        ),
        compiler_params=pltpu.CompilerParams(
            dimension_semantics=("parallel", "parallel")),
    )(x4)

    out_flat = out4.reshape(N, C, hw_pad)
    if pad:
        out_flat = out_flat[:, :, :HW]
    out = out_flat.reshape(N, C, H, W)
    if squeeze_batch:
        out = out[0]
    return out


if __name__ == "__main__":
    key = jax.random.PRNGKey(0)

    # 4D (N, C, H, W) input — HW is an exact multiple of 128 (no padding path).
    x = jax.random.normal(key, (2, 4, 16, 16), dtype=jnp.float32)
    y = softmax2d(x)
    jax.block_until_ready(y)

    y_ref = jax.nn.softmax(x, axis=-3)
    assert y.shape == x.shape
    assert jnp.allclose(y, y_ref, atol=1e-5, rtol=1e-5)
    assert jnp.allclose(jnp.sum(y, axis=-3), 1.0, atol=1e-5)

    # 3D (C, H, W) input path.
    x3 = jax.random.normal(jax.random.PRNGKey(1), (4, 16, 16), dtype=jnp.float32)
    y3 = softmax2d(x3)
    jax.block_until_ready(y3)
    y3_ref = jax.nn.softmax(x3, axis=-3)
    assert y3.shape == x3.shape
    assert jnp.allclose(y3, y3_ref, atol=1e-5, rtol=1e-5)

    # Odd spatial size (exercises the lane-padding path).
    xo = jax.random.normal(jax.random.PRNGKey(2), (2, 3, 7, 9), dtype=jnp.float32)
    yo = softmax2d(xo)
    jax.block_until_ready(yo)
    yo_ref = jax.nn.softmax(xo, axis=-3)
    assert yo.shape == xo.shape
    assert jnp.allclose(yo, yo_ref, atol=1e-5, rtol=1e-5)

    print("KERNEL_OK")
</pallas_src>

<mosaic_0001>
module attributes {stable_mosaic.version = 11 : i64} {
  func.func @_softmax2d_kernel(%arg0: i32, %arg1: i32, %arg2: memref<1x4x2x128xf32, #tpu.memory_space<vmem>>, %arg3: memref<1x4x2x128xf32, #tpu.memory_space<vmem>>) attributes {dimension_semantics = [#tpu.dimension_semantics<parallel>, #tpu.dimension_semantics<parallel>], iteration_bounds = array<i64: 2, 1>, scalar_prefetch = 0 : i64, scratch_operands = 0 : i64, tpu.core_type = #tpu.core_type<tc>, window_params = [{transform_indices = @transform_0, window_bounds = array<i64: 1, 4, 2, 128>}, {transform_indices = @transform_1, window_bounds = array<i64: 1, 4, 2, 128>}]} {
    %c0 = arith.constant 0 : index
    %c0_0 = arith.constant 0 : index
    %c0_1 = arith.constant 0 : index
    %c0_2 = arith.constant 0 : index
    %0 = vector.load %arg2[%c0, %c0_0, %c0_1, %c0_2] : memref<1x4x2x128xf32, #tpu.memory_space<vmem>>, vector<1x4x2x128xf32>
    %cst = arith.constant dense<0xFF800000> : vector<1x2x128xf32>
    %1 = vector.multi_reduction <maximumf>, %0, %cst [1] : vector<1x4x2x128xf32> to vector<1x2x128xf32>
    %2 = vector.shape_cast %1 : vector<1x2x128xf32> to vector<1x1x2x128xf32>
    %3 = vector.broadcast %2 : vector<1x1x2x128xf32> to vector<1x4x2x128xf32>
    %4 = arith.subf %0, %3 : vector<1x4x2x128xf32>
    %5 = math.exp %4 : vector<1x4x2x128xf32>
    %cst_3 = arith.constant dense<0.000000e+00> : vector<1x2x128xf32>
    %6 = vector.multi_reduction <add>, %5, %cst_3 [1] : vector<1x4x2x128xf32> to vector<1x2x128xf32>
    %7 = vector.shape_cast %6 : vector<1x2x128xf32> to vector<1x1x2x128xf32>
    %8 = tpu.reciprocal %7 {approx = true} : vector<1x1x2x128xf32> -> vector<1x1x2x128xf32>
    %9 = arith.mulf %7, %8 : vector<1x1x2x128xf32>
    %cst_4 = arith.constant 2.000000e+00 : f32
    %10 = vector.broadcast %cst_4 : f32 to vector<1x1x2x128xf32>
    %11 = arith.subf %10, %9 : vector<1x1x2x128xf32>
    %12 = arith.mulf %8, %11 : vector<1x1x2x128xf32>
    %13 = vector.broadcast %12 : vector<1x1x2x128xf32> to vector<1x4x2x128xf32>
    %14 = arith.mulf %5, %13 : vector<1x4x2x128xf32>
    %c0_5 = arith.constant 0 : index
    %c0_6 = arith.constant 0 : index
    %c0_7 = arith.constant 0 : index
    %c0_8 = arith.constant 0 : index
    %15 = vector.load %arg3[%c0_5, %c0_6, %c0_7, %c0_8] : memref<1x4x2x128xf32, #tpu.memory_space<vmem>>, vector<1x4x2x128xf32>
    tpu.vector_store %arg3[%c0_5, %c0_6, %c0_7, %c0_8], %14 {strides = array<i32>} : memref<1x4x2x128xf32, #tpu.memory_space<vmem>>, vector<1x4x2x128xf32>,
    return
  }
  func.func @transform_0(%arg0: i32, %arg1: i32) -> (i32, i32, i32, i32) {
    %c0_i32 = arith.constant 0 : i32
    %c0_i32_0 = arith.constant 0 : i32
    %c0_i32_1 = arith.constant 0 : i32
    return %arg0, %c0_i32, %arg1, %c0_i32_0 : i32, i32, i32, i32
  }
  func.func @transform_1(%arg0: i32, %arg1: i32) -> (i32, i32, i32, i32) {
    %c0_i32 = arith.constant 0 : i32
    %c0_i32_0 = arith.constant 0 : i32
    %c0_i32_1 = arith.constant 0 : i32
    return %arg0, %c0_i32, %arg1, %c0_i32_0 : i32, i32, i32, i32
  }
}

</mosaic_0001>

<llo_original>
// kernel: tpu_custom_call.1
$region0: #{tpu_custom_call.1}
  #allocation0 [shape = 'u32[]', space=smem, size = 0x4, offset = 0x4, fixed_abs, tag = 'smem constant byte address 0x4 - core index']
  #allocation1 [shape = 'u32[72,128]{1,0:T(1,128)}', space=vmem, size = 0x9000, scoped, tag = 'internal scratch']
  %s0 = inlined_call_operand.hbm [shape: f32[2,4,2,128], index: 0, kind: input, shape index: {}]
  %s1 = inlined_call_operand.hbm [shape: f32[2,4,2,128], index: 1, kind: output, shape index: {}]
  %s2 = sld [smem:[#allocation0]]
  $region41: #{tpu_custom_call.1} parent=0
    _
  %s4 = ssub.s32 1, %s2
  %s5 = scalar_select 0, %s4, %s2
  $region1: #{tpu_custom_call.1} parent=0
    #allocation2 [shape = 'u8[8192]{0}', space=vmem, size = 0x2000, scoped, tag = 'input window, operand 0']
    #allocation3 [shape = 's32[2]{0}', space=sflag, size = 0x8, scoped, tag = 'scoped memory for tpu_custom_call.1']
    #allocation4 [shape = 's32[2]{0}', space=sflag, size = 0x8, scoped, tag = 'scoped memory for tpu_custom_call.1']
    #allocation5 [shape = 'u8[8192]{0}', space=vmem, size = 0x2000, scoped, tag = 'output window, operand 0']
    %6 = vsyncpa [#allocation3], 0
    %s7 = scalar_lea.sflag [#allocation3], 1
    %8 = vsyncpa %s7, 0
    %9 = vsyncpa [#allocation4], 0
    %s10 = scalar_lea.sflag [#allocation4], 1
    %11 = vsyncpa %s10, 0
    loop: start=0, step=1, limit=4
    $region2: #{tpu_custom_call.1} parent=1 // loop_pre_header
      _
    $region3: #{tpu_custom_call.1} parent=1 // loop_header
      %s13 = sphi 0, %s17
      %p14 = scmp.ge.s32.totalorder %s13, 4
      %s20 = sphi 0, %s32
      %s21 = sphi 0, %s28
      %s22 = sphi 0, %s20
      %s23 = sphi 0, %s21
      %s24 = sphi 0, %s22
      %s25 = sphi 0, %s23
      %s37 = sphi 0, %s39
      %s40 = sphi 0, %s37
      %s41 = sphi 0, %s40
      %s57 = sphi 0, %s41
      %s65 = sphi 0, %s67
      %s68 = sphi 0, %s65
      %s69 = sphi 0, %s68
      %s85 = sphi 0, %s69
    $region4: #{tpu_custom_call.1} parent=1 // loop_header_branch
      %16 = sbr.rel (%p14) target = $region8
    $region5: #{tpu_custom_call.1} parent=1 // loop_body
      %s18 = ssub.s32 %s13, 1
      %s19 = ssub.s32 %s13, 2
      %s26 = sadd.s32 1, %s21
      %p27 = scmp.ge.s32.totalorder %s26, 1
      %s28 = scalar_select %p27, 0, %s26
      %s29 = sadd.s32 1, %s20
      %s30 = scalar_select %p27, %s29, %s20
      %p31 = scmp.ge.s32.totalorder %s30, 2
      %s32 = scalar_select %p31, 0, %s30
      %s33 = ssub.s32 %s20, %s32
      %s34 = ssub.s32 %s21, %s28
      %s35 = sor.u32 %s33, %s34
      %p36 = scmp.eq.s32.totalorder %s35, 0
      %s38 = sadd.s32 %s37, 1
      %s39 = scalar_select %p36, %s37, %s38
      %p42 = pneg %p36
      %p43 = scmp.eq.s32.totalorder %s13, 1
      %p44 = por %p42, %p43
      %p45 = scmp.ne.s32.totalorder %s37, %s40
      %p46 = scmp.eq.s32.totalorder %s13, 0
      %p47 = por %p45, %p46
      %p48 = scmp.ne.s32.totalorder %s37, %s40
      %p49 = scmp.eq.s32.totalorder %s18, 1
      %p50 = por %p48, %p49
      %p51 = scmp.ne.s32.totalorder %s40, %s41
      %p52 = scmp.eq.s32.totalorder %s18, 0
      %p53 = por %p51, %p52
      %p54 = scmp.ne.s32.totalorder %s40, %s41
      %p55 = scmp.eq.s32.totalorder %s19, 1
      %p56 = por %p54, %p55
      %p58 = scmp.ne.s32.totalorder %s41, %s57
      %p59 = scmp.eq.s32.totalorder %s19, 0
      %p60 = por %p58, %p59
      %s61 = ssub.s32 %s20, %s32
      %s62 = ssub.s32 %s21, %s28
      %s63 = sor.u32 %s61, %s62
      %p64 = scmp.eq.s32.totalorder %s63, 0
      %s66 = sadd.s32 %s65, 1
      %s67 = scalar_select %p64, %s65, %s66
      %p70 = pneg %p64
      %p71 = scmp.eq.s32.totalorder %s13, 1
      %p72 = por %p70, %p71
      %p73 = scmp.ne.s32.totalorder %s65, %s68
      %p74 = scmp.eq.s32.totalorder %s13, 0
      %p75 = por %p73, %p74
      %p76 = scmp.ne.s32.totalorder %s65, %s68
      %p77 = scmp.eq.s32.totalorder %s18, 1
      %p78 = por %p76, %p77
      %p79 = scmp.ne.s32.totalorder %s68, %s69
      %p80 = scmp.eq.s32.totalorder %s18, 0
      %p81 = por %p79, %p80
      %p82 = scmp.ne.s32.totalorder %s68, %s69
      %p83 = scmp.eq.s32.totalorder %s19, 1
      %p84 = por %p82, %p83
      %p86 = scmp.ne.s32.totalorder %s69, %s85
      %p87 = scmp.eq.s32.totalorder %s19, 0
      %p88 = por %p86, %p87
      %p89 = scmp.le.s32.totalorder 1, %s13
      %p90 = scmp.lt.s32.totalorder %s13, 3
      %p91 = pnand %p89, %p90
      %p92 = pneg %p91
      // Predicated region
      $region9: #{tpu_custom_call.1} parent=5 // pred_check
        _
      $region10: #{tpu_custom_call.1} parent=5 // pred_check_branch
        %94 = sbr.rel (%p91) target = $region12
      $region11: #{tpu_custom_call.1} parent=5 // pred_region
        %s95 = ssub.s32 %s13, 1
      $region12: #{tpu_custom_call.1} parent=5 // pred_fallthru
        _
      %p96 = scmp.lt.s32.totalorder %s13, 2
      // Predicated region
      $region13: #{tpu_custom_call.1} parent=5 // pred_check
        %p97 = pneg %p96
      $region14: #{tpu_custom_call.1} parent=5 // pred_check_branch
        %99 = sbr.rel (%p97) target = $region16
      $region15: #{tpu_custom_call.1} parent=5 // pred_region
        // Predicated region
        $region17: #{tpu_custom_call.1} parent=15 // pred_check
          %p100 = pneg %p47
        $region18: #{tpu_custom_call.1} parent=15 // pred_check_branch
          %102 = sbr.rel (%p100) target = $region20
        $region19: #{tpu_custom_call.1} parent=15 // pred_region
          %s103 = sand.u32 %s37, 1
          %s104 = scalar_lea.sflag [#allocation3], %s103
          %s105 = sand.u32 %s37, 1
          %s106 = smul.addr %s105, 8
          %s107 = scalar_lea.vmem [#allocation2], %s106
          %109 = vsyncadd %s104, 0
          %s110 = smul.addr %s20, 4
          %s111 = sadd.s32 %s21, %s110
          %s112 = smul.addr %s111, 2
          %s113 = scalar_lea.hbm %s0, %s112
          %s114 = sshll.u32 %s113, 4
          %s115 = int_to_ptr.hbm [resolvable:$true] %s114
          %s116 = sshll.u32 %s107, 4
          %s117 = int_to_ptr.vmem [resolvable:$true] %s116
          %122 = dma.hbm_to_vmem [thread:$0]  %s115, 128, %s117, %s104, 32, 32, 2
        $region20: #{tpu_custom_call.1} parent=15 // pred_fallthru
          _
      $region16: #{tpu_custom_call.1} parent=5 // pred_fallthru
        _
      %p123 = scmp.le.s32.totalorder 1, %s13
      %p124 = scmp.lt.s32.totalorder %s13, 3
      %p125 = pnand %p123, %p124
      %p126 = pneg %p125
      // Predicated region
      $region21: #{tpu_custom_call.1} parent=5 // pred_check
        _
      $region22: #{tpu_custom_call.1} parent=5 // pred_check_branch
        %128 = sbr.rel (%p125) target = $region24
      $region23: #{tpu_custom_call.1} parent=5 // pred_region
        %s129 = ssub.s32 %s13, 1
        %s130 = sand.u32 %s40, 1
        %s131 = scalar_lea.sflag [#allocation3], %s130
        %s132 = sand.u32 %s40, 1
        %s133 = smul.addr %s132, 8
        %s134 = scalar_lea.vmem [#allocation2], %s133
        // Predicated region
        $region25: #{tpu_custom_call.1} parent=23 // pred_check
          %p135 = pneg %p53
        $region26: #{tpu_custom_call.1} parent=23 // pred_check_branch
          %137 = sbr.rel (%p135) target = $region28
        $region27: #{tpu_custom_call.1} parent=23 // pred_region
          %139 = dma.done %s131, 128
        $region28: #{tpu_custom_call.1} parent=23 // pred_fallthru
          _
        %s140 = sand.u32 %s40, 1
        %s141 = scalar_lea.sflag [#allocation3], %s140
        %s142 = sand.u32 %s40, 1
        %s143 = smul.addr %s142, 8
        %s144 = scalar_lea.vmem [#allocation2], %s143
        %p145 = pneg %p53
        %p146 = pneg %p50
        %p147 = pneg %p81
        %p148 = pneg %p78
        %s149 = sand.u32 %s68, 1
        %s150 = scalar_lea.sflag [#allocation4], %s149
        %s151 = sand.u32 %s68, 1
        %s152 = smul.addr %s151, 8
        %s153 = scalar_lea.vmem [#allocation5], %s152
        %v154 = vld [vmem:[%s134] sm:$0x3]
        %v155 = vld [vmem:[%s134 + $0x2] sm:$0x3]
        %v156 = vld [vmem:[%s134 + $0x4] sm:$0x3]
        %v157 = vld [vmem:[%s134 + $0x6] sm:$0x3]
        %vm158 = vcmask 1041408
        %v159 = vsel %vm158, %v154, -inf
        %v160 = vsel %vm158, %v155, -inf
        %v161 = vsel %vm158, %v156, -inf
        %v162 = vsel %vm158, %v157, -inf
        %v163 = vmax.f32 %v159, %v160
        %v164 = vmax.f32 %v161, %v162
        %v165 = vmax.f32 %v163, %v164
        %v166 = vsub.f32 %v154, %v165
        %v167 = vsub.f32 %v155, %v165
        %v168 = vsub.f32 %v156, %v165
        %v169 = vsub.f32 %v157, %v165
        %v170 = vmul.f32 %v166, 1.442695
        %v171 = vpow.pop %v170
        %v172 = vmul.f32 %v167, 1.442695
        %v173 = vpow.pop %v172
        %v174 = vmul.f32 %v168, 1.442695
        %v175 = vpow.pop %v174
        %v176 = vmul.f32 %v169, 1.442695
        %v177 = vpow.pop %v176
        %v178 = vsel %vm158, %v171, 0.0
        %v179 = vsel %vm158, %v173, 0.0
        %v180 = vadd.f32 %v178, %v179
        %v181 = vsel %vm158, %v175, 0.0
        %v182 = vadd.f32 %v180, %v181
        %v183 = vsel %vm158, %v177, 0.0
        %v184 = vadd.f32 %v182, %v183
        %v185 = vrcp.pop %v184
        %v186 = vmul.f32 %v184, %v185
        %v187 = vsub.f32 2.0, %v186
        %v188 = vmul.f32 %v185, %v187
        %v189 = vmul.f32 %v171, %v188
        %v190 = vmul.f32 %v173, %v188
        %v191 = vmul.f32 %v175, %v188
        %v192 = vmul.f32 %v177, %v188
        %193 = vst [vmem:[%s153] sm:$0x3] %v189
        %194 = vst [vmem:[%s153 + $0x2] sm:$0x3] %v190
        %195 = vst [vmem:[%s153 + $0x4] sm:$0x3] %v191
        %196 = vst [vmem:[%s153 + $0x6] sm:$0x3] %v192
        %s197 = sand.u32 %s68, 1
        %s198 = scalar_lea.sflag [#allocation4], %s197
        %s199 = sand.u32 %s68, 1
        %s200 = smul.addr %s199, 8
        %s201 = scalar_lea.vmem [#allocation5], %s200
        // Predicated region
        $region29: #{tpu_custom_call.1} parent=23 // pred_check
          %p202 = pneg %p78
        $region30: #{tpu_custom_call.1} parent=23 // pred_check_branch
          %204 = sbr.rel (%p202) target = $region32
        $region31: #{tpu_custom_call.1} parent=23 // pred_region
          %206 = vsyncadd %s198, 0
          %s207 = smul.addr %s22, 4
          %s208 = sadd.s32 %s23, %s207
          %s209 = smul.addr %s208, 2
          %s210 = scalar_lea.hbm %s1, %s209
          %s211 = sshll.u32 %s201, 4
          %s212 = int_to_ptr.vmem [resolvable:$true] %s211
          %s213 = sshll.u32 %s210, 4
          %s214 = int_to_ptr.hbm [resolvable:$true] %s213
          %219 = dma.vmem_to_hbm [thread:$0]  %s212, 128, %s214, %s198, 32, 32, 2
        $region32: #{tpu_custom_call.1} parent=23 // pred_fallthru
          _
      $region24: #{tpu_custom_call.1} parent=5 // pred_fallthru
        _
      %p220 = scmp.le.s32.totalorder 2, %s13
      // Predicated region
      $region33: #{tpu_custom_call.1} parent=5 // pred_check
        %p221 = pneg %p220
      $region34: #{tpu_custom_call.1} parent=5 // pred_check_branch
        %223 = sbr.rel (%p221) target = $region36
      $region35: #{tpu_custom_call.1} parent=5 // pred_region
        %s224 = ssub.s32 %s13, 2
        // Predicated region
        $region37: #{tpu_custom_call.1} parent=35 // pred_check
          %p225 = pneg %p84
        $region38: #{tpu_custom_call.1} parent=35 // pred_check_branch
          %227 = sbr.rel (%p225) target = $region40
        $region39: #{tpu_custom_call.1} parent=35 // pred_region
          %s228 = sand.u32 %s69, 1
          %s229 = scalar_lea.sflag [#allocation4], %s228
          %s230 = sand.u32 %s69, 1
          %s231 = smul.addr %s230, 8
          %s232 = scalar_lea.vmem [#allocation5], %s231
          %234 = dma.done %s229, 128
        $region40: #{tpu_custom_call.1} parent=35 // pred_fallthru
          _
      $region36: #{tpu_custom_call.1} parent=5 // pred_fallthru
        _
    $region6: #{tpu_custom_call.1} parent=1 // loop_footer
      %s17 = sadd.s32 1, %s13
    $region7: #{tpu_custom_call.1} parent=1 // loop_footer_branch
      %12 = sbr.rel target = $region3
    $region8: #{tpu_custom_call.1} parent=1 // loop_exit
      _
    %235 = vsyncpa [#allocation3], 1
    %s236 = scalar_lea.sflag [#allocation3], 1
    %237 = vsyncpa %s236, 1
    %238 = vsyncpa [#allocation4], 1
    %s239 = scalar_lea.sflag [#allocation4], 1
    %240 = vsyncpa %s239, 1

</llo_original>
